<compile_context>
chip_gen: v7x
topology: tpu7x:2x2x1
jax: 0.10.0
libtpu: 0.0.40
codegen_flags: <defaults>
</compile_context>

<pallas_src>
import functools

import jax
import jax.numpy as jnp
from jax.experimental import pallas as pl
from jax.experimental.pallas import tpu as pltpu

_LANE = 128
_BF16_SUBLANE = 16      # bf16 sublane-pack granularity
_BN_EPS = 1e-5


def _round_up(x, m):
    return ((x + m - 1) // m) * m


# ----------------------------------------------------------------------------
# Kernel: entire MLP, one invocation per batch tile
# ----------------------------------------------------------------------------
def _fused_mlp_kernel(x_ref, w0_ref, wrest_ref, b_ref, o_ref, *, num_hidden):
    """relu(x @ W0' + b0') -> ... -> relu -> (h @ Wout + bout).

    x_ref:     (TB, in_dim)   bf16 input batch tile (pipelined)
    w0_ref:    (in_dim, PAD)  bf16 first hidden weight (BN folded), resident
    wrest_ref: (L, PAD, PAD)  bf16 hidden layers 1..L-1 (BN folded) + output W
    b_ref:     (L+1, 1, PAD)  f32 folded biases (hidden) + output bias
    o_ref:     (TB, PAD)      f32 lane-dense padded output
    """
    # hidden layer 0: Linear (BN folded in) + ReLU   (Dropout = identity, eval)
    h = jnp.dot(x_ref[...], w0_ref[...], preferred_element_type=jnp.float32)
    h = jnp.maximum(h + b_ref[0], 0.0)
    # remaining hidden layers (bf16 operands, f32 accumulation / bias / ReLU)
    for l in range(1, num_hidden):
        h = jnp.dot(h.astype(jnp.bfloat16), wrest_ref[l - 1],
                    preferred_element_type=jnp.float32)
        h = jnp.maximum(h + b_ref[l], 0.0)
    # output layer (no ReLU)
    y = jnp.dot(h.astype(jnp.bfloat16), wrest_ref[num_hidden - 1],
                preferred_element_type=jnp.float32)
    o_ref[...] = y + b_ref[num_hidden]


# ----------------------------------------------------------------------------
# One-time parameter preparation: fold BN, pad to 128 lanes, pack, cast bf16
# ----------------------------------------------------------------------------
def prepare_packed_params(params, input_dim, output_dim):
    hidden = params["hidden"]
    out = params["out"]
    num_hidden = len(hidden)
    assert num_hidden >= 1
    dims = [layer["w"].shape[1] for layer in hidden] + [output_dim]
    pad = _round_up(max(max(dims), _LANE), _LANE)

    def fold(layer):
        scale = layer["gamma"] * jax.lax.rsqrt(layer["var"] + _BN_EPS)
        w = layer["w"].astype(jnp.float32) * scale[None, :]
        b = (layer["b"] - layer["mean"]) * scale + layer["beta"]
        return w, b

    def pad2(w, rows, cols):
        return jnp.pad(w, ((0, rows - w.shape[0]), (0, cols - w.shape[1])))

    def pad1(b, cols):
        return jnp.pad(b, ((0, cols - b.shape[0]),))

    w0_f, b0_f = fold(hidden[0])
    w0 = pad2(w0_f, input_dim, pad).astype(jnp.bfloat16)
    biases = [pad1(b0_f, pad).astype(jnp.float32)]
    wrest = []
    for l in range(1, num_hidden):
        w_f, b_f = fold(hidden[l])
        wrest.append(pad2(w_f, pad, pad))
        biases.append(pad1(b_f, pad).astype(jnp.float32))
    wrest.append(pad2(out["w"].astype(jnp.float32), pad, pad))
    biases.append(pad1(out["b"].astype(jnp.float32), pad))

    return dict(
        w0=w0,                                        # (in_dim, pad)   bf16
        wrest=jnp.stack(wrest).astype(jnp.bfloat16),  # (L, pad, pad)   bf16
        b=jnp.stack(biases)[:, None, :],              # (L+1, 1, pad)   f32
        num_hidden=num_hidden,
        pad=pad,
        input_dim=input_dim,
        output_dim=output_dim,
    )


# ----------------------------------------------------------------------------
# Forward: single pallas_call over a batch-parallel grid
# ----------------------------------------------------------------------------
def fused_mlp_forward(packed, x):
    B = x.shape[0]
    pad = packed["pad"]
    L = packed["num_hidden"]
    in_dim = packed["input_dim"]
    out_dim = packed["output_dim"]

    # Batch tiling: aim for >= 2 grid steps (both v7x TensorCores get a tile)
    # whenever the batch can be split; rows rounded to bf16 sublane packing;
    # tile capped at 512 rows.
    tb = min(512, _round_up(max(pl.cdiv(B, 2), 1), _BF16_SUBLANE))
    padded_b = _round_up(B, tb)
    x = x.astype(jnp.bfloat16)
    if padded_b != B:
        x = jnp.pad(x, ((0, padded_b - B), (0, 0)))
    grid = (padded_b // tb,)

    # Explicit VMEM budget: resident weights/biases + double-buffered in/out
    # tiles + f32 activation spill headroom.
    weight_bytes = (in_dim * pad + L * pad * pad) * 2        # bf16
    bias_bytes = (L + 1) * pad * 4                           # f32
    tile_bytes = 2 * (tb * in_dim * 2) + 2 * (tb * pad * 4)  # pipelined x / o
    act_bytes = 2 * tb * pad * 4                             # h spill headroom
    resident = weight_bytes + bias_bytes
    assert resident < 24 * 1024 * 1024, (
        "resident packed weights exceed the safe v7x VMEM budget; "
        "switch to a layer-/K-tiled grid or weight streaming")
    # TODO(synk): add a weight-streaming (pltpu.emit_pipeline) fallback for
    # MLPs whose packed weights exceed ~24 MiB instead of asserting.
    vmem_limit = int(min(64 * 1024 * 1024,
                         max(16 * 1024 * 1024,
                             2 * (resident + tile_bytes + act_bytes))))

    flops = 2 * padded_b * (in_dim * pad + L * pad * pad)
    bytes_accessed = (padded_b * in_dim * 2 + weight_bytes + bias_bytes
                      + padded_b * pad * 4)

    kernel = functools.partial(_fused_mlp_kernel, num_hidden=L)
    # Grid-invariant operands: whole-array resident in VMEM, single-buffered.
    resident_spec = pl.BlockSpec(memory_space=pltpu.MemorySpace.VMEM)

    out = pl.pallas_call(
        kernel,
        out_shape=jax.ShapeDtypeStruct((padded_b, pad), jnp.float32),
        grid=grid,
        in_specs=[
            pl.BlockSpec((tb, in_dim), lambda i: (i, 0)),   # x tile (pipelined)
            resident_spec,                                  # W0
            resident_spec,                                  # packed Ws
            resident_spec,                                  # packed biases
        ],
        out_specs=pl.BlockSpec((tb, pad), lambda i: (i, 0)),
        compiler_params=pltpu.CompilerParams(
            dimension_semantics=("parallel",),              # megacore sharding
            vmem_limit_bytes=vmem_limit),
        cost_estimate=pl.CostEstimate(
            flops=int(flops), transcendentals=0,
            bytes_accessed=int(bytes_accessed)),
    )(x, packed["w0"], packed["wrest"], packed["b"])
    return out[:B, :out_dim]


# ----------------------------------------------------------------------------
# Parameter construction (deterministic, PyTorch-style uniform init)
# ----------------------------------------------------------------------------
def init_params(key, input_dim, output_dim, hidden_layers):
    params = {"hidden": [], "out": None}
    in_dim = input_dim
    for h in hidden_layers:
        key, kw, kb = jax.random.split(key, 3)
        bound = 1.0 / (in_dim ** 0.5)
        w = jax.random.uniform(kw, (in_dim, h), jnp.float32, -bound, bound)
        b = jax.random.uniform(kb, (h,), jnp.float32, -bound, bound)
        params["hidden"].append(dict(
            w=w, b=b,
            gamma=jnp.ones((h,), jnp.float32),
            beta=jnp.zeros((h,), jnp.float32),
            mean=jnp.zeros((h,), jnp.float32),
            var=jnp.ones((h,), jnp.float32),
        ))
        in_dim = h
    key, kw, kb = jax.random.split(key, 3)
    bound = 1.0 / (in_dim ** 0.5)
    params["out"] = dict(
        w=jax.random.uniform(kw, (in_dim, output_dim), jnp.float32,
                             -bound, bound),
        b=jax.random.uniform(kb, (output_dim,), jnp.float32, -bound, bound),
    )
    return params


# ----------------------------------------------------------------------------
# Reference (pure-JAX f32, unfolded params) for a sanity check
# ----------------------------------------------------------------------------
def reference_forward(params, x):
    x = x.astype(jnp.float32)
    for layer in params["hidden"]:
        y = x @ layer["w"] + layer["b"]
        y = (y - layer["mean"]) / jnp.sqrt(layer["var"] + _BN_EPS)
        y = y * layer["gamma"] + layer["beta"]
        x = jnp.maximum(y, 0.0)
    return x @ params["out"]["w"] + params["out"]["b"]


if __name__ == "__main__":
    INPUT_DIM, OUTPUT_DIM = 32, 8
    HIDDEN_LAYERS = [64, 32]
    BATCH = 32   # -> 2 grid steps of 16 rows: both v7x TensorCores get a tile

    key = jax.random.PRNGKey(0)
    key, kx = jax.random.split(key)
    x = jax.random.normal(kx, (BATCH, INPUT_DIM), jnp.float32)

    params = init_params(key, INPUT_DIM, OUTPUT_DIM, HIDDEN_LAYERS)
    packed = prepare_packed_params(params, INPUT_DIM, OUTPUT_DIM)

    out = fused_mlp_forward(packed, x)
    out = jax.block_until_ready(out)

    ref = reference_forward(params, x)
    assert out.shape == (BATCH, OUTPUT_DIM)
    # bf16 matmul operands (f32 accumulation) vs pure-f32 reference -> loose
    # tolerance per the perf-review correctness note.
    assert jnp.allclose(out, ref, atol=5e-2, rtol=5e-2), "mismatch vs reference"

    print("KERNEL_OK")
</pallas_src>

<mosaic_0001>
module attributes {stable_mosaic.version = 11 : i64} {
  func.func @_fused_mlp_kernel(%arg0: i32, %arg1: memref<16x32xbf16, #tpu.memory_space<vmem>>, %arg2: memref<32x128xbf16, #tpu.memory_space<vmem>>, %arg3: memref<2x128x128xbf16, #tpu.memory_space<vmem>>, %arg4: memref<3x1x128xf32, #tpu.memory_space<vmem>>, %arg5: memref<16x128xf32, #tpu.memory_space<vmem>>) attributes {dimension_semantics = [#tpu.dimension_semantics<parallel>], iteration_bounds = array<i64: 2>, scalar_prefetch = 0 : i64, scratch_operands = 0 : i64, tpu.core_type = #tpu.core_type<tc>, window_params = [{transform_indices = @transform_0, window_bounds = array<i64: 16, 32>}, {pipeline_mode = #tpu.pipeline_mode<synchronous>, transform_indices = @transform_1, window_bounds = array<i64: 32, 128>}, {pipeline_mode = #tpu.pipeline_mode<synchronous>, transform_indices = @transform_2, window_bounds = array<i64: 2, 128, 128>}, {pipeline_mode = #tpu.pipeline_mode<synchronous>, transform_indices = @transform_3, window_bounds = array<i64: 3, 1, 128>}, {transform_indices = @transform_4, window_bounds = array<i64: 16, 128>}]} {
    %c0 = arith.constant 0 : index
    %c0_0 = arith.constant 0 : index
    %0 = vector.load %arg1[%c0, %c0_0] : memref<16x32xbf16, #tpu.memory_space<vmem>>, vector<16x32xbf16>
    %c0_1 = arith.constant 0 : index
    %c0_2 = arith.constant 0 : index
    %1 = vector.load %arg2[%c0_1, %c0_2] : memref<32x128xbf16, #tpu.memory_space<vmem>>, vector<32x128xbf16>
    %cst = arith.constant dense<0.000000e+00> : vector<16x128xf32>
    %2 = tpu.matmul %0, %1, %cst {dimension_numbers = #tpu.dot_dimension_numbers<[1], [0], [0], [1], [0, 0, 1, 1], [], []>} : vector<16x32xbf16>, vector<32x128xbf16>, vector<16x128xf32> -> vector<16x128xf32>
    %c0_3 = arith.constant 0 : index
    %c0_4 = arith.constant 0 : index
    %c0_5 = arith.constant 0 : index
    %3 = vector.load %arg4[%c0_3, %c0_4, %c0_5] : memref<3x1x128xf32, #tpu.memory_space<vmem>>, vector<1x1x128xf32>
    %4 = vector.shape_cast %3 : vector<1x1x128xf32> to vector<1x128xf32>
    %5 = vector.broadcast %4 : vector<1x128xf32> to vector<16x128xf32>
    %6 = arith.addf %2, %5 : vector<16x128xf32>
    %cst_6 = arith.constant 0.000000e+00 : f32
    %7 = vector.broadcast %cst_6 : f32 to vector<16x128xf32>
    %8 = arith.maximumf %6, %7 : vector<16x128xf32>
    %9 = arith.truncf %8 : vector<16x128xf32> to vector<16x128xbf16>
    %c0_7 = arith.constant 0 : index
    %c0_8 = arith.constant 0 : index
    %c0_9 = arith.constant 0 : index
    %10 = vector.load %arg3[%c0_7, %c0_8, %c0_9] : memref<2x128x128xbf16, #tpu.memory_space<vmem>>, vector<1x128x128xbf16>
    %11 = vector.shape_cast %10 : vector<1x128x128xbf16> to vector<128x128xbf16>
    %cst_10 = arith.constant dense<0.000000e+00> : vector<16x128xf32>
    %12 = tpu.matmul %9, %11, %cst_10 {dimension_numbers = #tpu.dot_dimension_numbers<[1], [0], [0], [1], [0, 0, 1, 1], [], []>} : vector<16x128xbf16>, vector<128x128xbf16>, vector<16x128xf32> -> vector<16x128xf32>
    %c1 = arith.constant 1 : index
    %c0_11 = arith.constant 0 : index
    %c0_12 = arith.constant 0 : index
    %13 = vector.load %arg4[%c1, %c0_11, %c0_12] : memref<3x1x128xf32, #tpu.memory_space<vmem>>, vector<1x1x128xf32>
    %14 = vector.shape_cast %13 : vector<1x1x128xf32> to vector<1x128xf32>
    %15 = vector.broadcast %14 : vector<1x128xf32> to vector<16x128xf32>
    %16 = arith.addf %12, %15 : vector<16x128xf32>
    %cst_13 = arith.constant 0.000000e+00 : f32
    %17 = vector.broadcast %cst_13 : f32 to vector<16x128xf32>
    %18 = arith.maximumf %16, %17 : vector<16x128xf32>
    %19 = arith.truncf %18 : vector<16x128xf32> to vector<16x128xbf16>
    %c1_14 = arith.constant 1 : index
    %c0_15 = arith.constant 0 : index
    %c0_16 = arith.constant 0 : index
    %20 = vector.load %arg3[%c1_14, %c0_15, %c0_16] : memref<2x128x128xbf16, #tpu.memory_space<vmem>>, vector<1x128x128xbf16>
    %21 = vector.shape_cast %20 : vector<1x128x128xbf16> to vector<128x128xbf16>
    %cst_17 = arith.constant dense<0.000000e+00> : vector<16x128xf32>
    %22 = tpu.matmul %19, %21, %cst_17 {dimension_numbers = #tpu.dot_dimension_numbers<[1], [0], [0], [1], [0, 0, 1, 1], [], []>} : vector<16x128xbf16>, vector<128x128xbf16>, vector<16x128xf32> -> vector<16x128xf32>
    %c2 = arith.constant 2 : index
    %c0_18 = arith.constant 0 : index
    %c0_19 = arith.constant 0 : index
    %23 = vector.load %arg4[%c2, %c0_18, %c0_19] : memref<3x1x128xf32, #tpu.memory_space<vmem>>, vector<1x1x128xf32>
    %24 = vector.shape_cast %23 : vector<1x1x128xf32> to vector<1x128xf32>
    %25 = vector.broadcast %24 : vector<1x128xf32> to vector<16x128xf32>
    %26 = arith.addf %22, %25 : vector<16x128xf32>
    %c0_20 = arith.constant 0 : index
    %c0_21 = arith.constant 0 : index
    %27 = vector.load %arg5[%c0_20, %c0_21] : memref<16x128xf32, #tpu.memory_space<vmem>>, vector<16x128xf32>
    tpu.vector_store %arg5[%c0_20, %c0_21], %26 {strides = array<i32>} : memref<16x128xf32, #tpu.memory_space<vmem>>, vector<16x128xf32>,
    return
  }
  func.func @transform_0(%arg0: i32) -> (i32, i32) {
    %c0_i32 = arith.constant 0 : i32
    %c0_i32_0 = arith.constant 0 : i32
    return %arg0, %c0_i32 : i32, i32
  }
  func.func @transform_1(%arg0: i32) -> (i32, i32) {
    %c0_i32 = arith.constant 0 : i32
    %c0_i32_0 = arith.constant 0 : i32
    %c0_i32_1 = arith.constant 0 : i32
    return %c0_i32, %c0_i32_0 : i32, i32
  }
  func.func @transform_2(%arg0: i32) -> (i32, i32, i32) {
    %c0_i32 = arith.constant 0 : i32
    %c0_i32_0 = arith.constant 0 : i32
    %c0_i32_1 = arith.constant 0 : i32
    %c0_i32_2 = arith.constant 0 : i32
    return %c0_i32, %c0_i32_0, %c0_i32_1 : i32, i32, i32
  }
  func.func @transform_3(%arg0: i32) -> (i32, i32, i32) {
    %c0_i32 = arith.constant 0 : i32
    %c0_i32_0 = arith.constant 0 : i32
    %c0_i32_1 = arith.constant 0 : i32
    %c0_i32_2 = arith.constant 0 : i32
    return %c0_i32, %c0_i32_0, %c0_i32_1 : i32, i32, i32
  }
  func.func @transform_4(%arg0: i32) -> (i32, i32) {
    %c0_i32 = arith.constant 0 : i32
    %c0_i32_0 = arith.constant 0 : i32
    return %arg0, %c0_i32 : i32, i32
  }
}

</mosaic_0001>

<llo_original>
// kernel: tpu_custom_call.1
$region0: #{tpu_custom_call.1}
  #allocation0 [shape = 'u32[]', space=smem, size = 0x4, offset = 0x4, fixed_abs, tag = 'smem constant byte address 0x4 - core index']
  #allocation1 [shape = 'u32[144,128]{1,0:T(1,128)}', space=vmem, size = 0x12000, scoped, tag = 'internal scratch']
  %s0 = inlined_call_operand.hbm [shape: bf16[32,32], index: 0, kind: input, shape index: {}]
  %s1 = inlined_call_operand.hbm [shape: bf16[32,128], index: 1, kind: input, shape index: {}]
  %s2 = inlined_call_operand.hbm [shape: bf16[2,128,128], index: 2, kind: input, shape index: {}]
  %s3 = inlined_call_operand.vmem [shape: f32[3,1,128], index: 3, kind: input, shape index: {}]
  %s4 = inlined_call_operand.hbm [shape: f32[32,128], index: 4, kind: output, shape index: {}]
  %s5 = sld [smem:[#allocation0]]
  $region61: #{tpu_custom_call.1} parent=0
    _
  %s7 = ssub.s32 1, %s5
  %s8 = scalar_select 0, %s7, %s5
  $region1: #{tpu_custom_call.1} parent=0
    #allocation2 [shape = 'u8[8192]{0}', space=vmem, size = 0x2000, scoped, tag = 'input window, operand 0']
    #allocation3 [shape = 's32[2]{0}', space=sflag, size = 0x8, scoped, tag = 'scoped memory for tpu_custom_call.1']
    #allocation4 [shape = 's32[2]{0}', space=sflag, size = 0x8, scoped, tag = 'scoped memory for tpu_custom_call.1']
    #allocation5 [shape = 'u8[8192]{0}', space=vmem, size = 0x2000, scoped, tag = 'input window, operand 1, single buffered']
    #allocation6 [shape = 's32[1]{0}', space=sflag, size = 0x4, scoped, tag = 'scoped memory for tpu_custom_call.1']
    #allocation7 [shape = 'u8[65536]{0}', space=vmem, size = 0x10000, scoped, tag = 'input window, operand 2, single buffered']
    #allocation8 [shape = 'u8[16384]{0}', space=vmem, size = 0x4000, scoped, tag = 'output window, operand 0']
    %9 = vsyncpa [#allocation3], 0
    %s10 = scalar_lea.sflag [#allocation3], 1
    %11 = vsyncpa %s10, 0
    %12 = vsyncpa [#allocation6], 0
    %13 = vsyncpa [#allocation4], 0
    %s14 = scalar_lea.sflag [#allocation4], 1
    %15 = vsyncpa %s14, 0
    loop: start=0, step=1, limit=4
    $region2: #{tpu_custom_call.1} parent=1 // loop_pre_header
      _
    $region3: #{tpu_custom_call.1} parent=1 // loop_header
      %s17 = sphi 0, %s21
      %p18 = scmp.ge.s32.totalorder %s17, 4
      %s27 = sphi 0, %s29
      %s30 = sphi 0, %s27
      %s31 = sphi 0, %s30
      %s47 = sphi 0, %s31
      %s51 = sphi 0, %s51
      %s53 = sphi 0, %s51
      %s54 = sphi 0, %s53
      %s68 = sphi 0, %s54
      %s72 = sphi 0, %s72
      %s74 = sphi 0, %s72
      %s75 = sphi 0, %s74
      %s89 = sphi 0, %s75
      %s93 = sphi 0, %s93
      %s95 = sphi 0, %s93
      %s96 = sphi 0, %s95
      %s110 = sphi 0, %s96
      %s116 = sphi 0, %s118
      %s119 = sphi 0, %s116
      %s120 = sphi 0, %s119
      %s136 = sphi 0, %s120
    $region4: #{tpu_custom_call.1} parent=1 // loop_header_branch
      %20 = sbr.rel (%p18) target = $region8
    $region5: #{tpu_custom_call.1} parent=1 // loop_body
      %s22 = ssub.s32 %s17, 1
      %s23 = ssub.s32 %s17, 2
      %s24 = sadd.s32 %s17, 1
      %s25 = ssub.s32 %s17, %s24
      %p26 = scmp.eq.s32.totalorder %s25, 0
      %s28 = sadd.s32 %s27, 1
      %s29 = scalar_select %p26, %s27, %s28
      %p32 = pneg %p26
      %p33 = scmp.eq.s32.totalorder %s17, 1
      %p34 = por %p32, %p33
      %p35 = scmp.ne.s32.totalorder %s27, %s30
      %p36 = scmp.eq.s32.totalorder %s17, 0
      %p37 = por %p35, %p36
      %p38 = scmp.ne.s32.totalorder %s27, %s30
      %p39 = scmp.eq.s32.totalorder %s22, 1
      %p40 = por %p38, %p39
      %p41 = scmp.ne.s32.totalorder %s30, %s31
      %p42 = scmp.eq.s32.totalorder %s22, 0
      %p43 = por %p41, %p42
      %p44 = scmp.ne.s32.totalorder %s30, %s31
      %p45 = scmp.eq.s32.totalorder %s23, 1
      %p46 = por %p44, %p45
      %p48 = scmp.ne.s32.totalorder %s31, %s47
      %p49 = scmp.eq.s32.totalorder %s23, 0
      %p50 = por %p48, %p49
      %s52 = sadd.s32 %s51, 1
      %p55 = scmp.eq.s32.totalorder %s17, 1
      %p56 = scmp.ne.s32.totalorder %s51, %s53
      %p57 = scmp.eq.s32.totalorder %s17, 0
      %p58 = por %p56, %p57
      %p59 = scmp.ne.s32.totalorder %s51, %s53
      %p60 = scmp.eq.s32.totalorder %s22, 1
      %p61 = por %p59, %p60
      %p62 = scmp.ne.s32.totalorder %s53, %s54
      %p63 = scmp.eq.s32.totalorder %s22, 0
      %p64 = por %p62, %p63
      %p65 = scmp.ne.s32.totalorder %s53, %s54
      %p66 = scmp.eq.s32.totalorder %s23, 1
      %p67 = por %p65, %p66
      %p69 = scmp.ne.s32.totalorder %s54, %s68
      %p70 = scmp.eq.s32.totalorder %s23, 0
      %p71 = por %p69, %p70
      %s73 = sadd.s32 %s72, 1
      %p76 = scmp.eq.s32.totalorder %s17, 1
      %p77 = scmp.ne.s32.totalorder %s72, %s74
      %p78 = scmp.eq.s32.totalorder %s17, 0
      %p79 = por %p77, %p78
      %p80 = scmp.ne.s32.totalorder %s72, %s74
      %p81 = scmp.eq.s32.totalorder %s22, 1
      %p82 = por %p80, %p81
      %p83 = scmp.ne.s32.totalorder %s74, %s75
      %p84 = scmp.eq.s32.totalorder %s22, 0
      %p85 = por %p83, %p84
      %p86 = scmp.ne.s32.totalorder %s74, %s75
      %p87 = scmp.eq.s32.totalorder %s23, 1
      %p88 = por %p86, %p87
      %p90 = scmp.ne.s32.totalorder %s75, %s89
      %p91 = scmp.eq.s32.totalorder %s23, 0
      %p92 = por %p90, %p91
      %s94 = sadd.s32 %s93, 1
      %p97 = scmp.eq.s32.totalorder %s17, 1
      %p98 = scmp.ne.s32.totalorder %s93, %s95
      %p99 = scmp.eq.s32.totalorder %s17, 0
      %p100 = por %p98, %p99
      %p101 = scmp.ne.s32.totalorder %s93, %s95
      %p102 = scmp.eq.s32.totalorder %s22, 1
      %p103 = por %p101, %p102
      %p104 = scmp.ne.s32.totalorder %s95, %s96
      %p105 = scmp.eq.s32.totalorder %s22, 0
      %p106 = por %p104, %p105
      %p107 = scmp.ne.s32.totalorder %s95, %s96
      %p108 = scmp.eq.s32.totalorder %s23, 1
      %p109 = por %p107, %p108
      %p111 = scmp.ne.s32.totalorder %s96, %s110
      %p112 = scmp.eq.s32.totalorder %s23, 0
      %p113 = por %p111, %p112
      %s114 = ssub.s32 %s17, %s24
      %p115 = scmp.eq.s32.totalorder %s114, 0
      %s117 = sadd.s32 %s116, 1
      %s118 = scalar_select %p115, %s116, %s117
      %p121 = pneg %p115
      %p122 = scmp.eq.s32.totalorder %s17, 1
      %p123 = por %p121, %p122
      %p124 = scmp.ne.s32.totalorder %s116, %s119
      %p125 = scmp.eq.s32.totalorder %s17, 0
      %p126 = por %p124, %p125
      %p127 = scmp.ne.s32.totalorder %s116, %s119
      %p128 = scmp.eq.s32.totalorder %s22, 1
      %p129 = por %p127, %p128
      %p130 = scmp.ne.s32.totalorder %s119, %s120
      %p131 = scmp.eq.s32.totalorder %s22, 0
      %p132 = por %p130, %p131
      %p133 = scmp.ne.s32.totalorder %s119, %s120
      %p134 = scmp.eq.s32.totalorder %s23, 1
      %p135 = por %p133, %p134
      %p137 = scmp.ne.s32.totalorder %s120, %s136
      %p138 = scmp.eq.s32.totalorder %s23, 0
      %p139 = por %p137, %p138
      %p140 = scmp.le.s32.totalorder 1, %s17
      %p141 = scmp.lt.s32.totalorder %s17, 3
      %p142 = pnand %p140, %p141
      %p143 = pneg %p142
      // Predicated region
      $region9: #{tpu_custom_call.1} parent=5 // pred_check
        _
      $region10: #{tpu_custom_call.1} parent=5 // pred_check_branch
        %145 = sbr.rel (%p142) target = $region12
      $region11: #{tpu_custom_call.1} parent=5 // pred_region
        %s146 = ssub.s32 %s17, 1
        // Predicated region
        $region13: #{tpu_custom_call.1} parent=11 // pred_check
          %p147 = pneg %p64
        $region14: #{tpu_custom_call.1} parent=11 // pred_check_branch
          %149 = sbr.rel (%p147) target = $region16
        $region15: #{tpu_custom_call.1} parent=11 // pred_region
          %s151 = ssub.s32 256, 256
          %152 = vsyncadd [#allocation6], %s151
          %s153 = sshll.u32 [#allocation5], 4
          %s154 = int_to_ptr.vmem [resolvable:$true] %s153
          %159 = dma.hbm_to_vmem [thread:$0]  %s1, 256, %s154, [#allocation6], 64, 64, 4
        $region16: #{tpu_custom_call.1} parent=11 // pred_fallthru
          _
        // Predicated region
        $region17: #{tpu_custom_call.1} parent=11 // pred_check
          %p160 = pneg %p85
        $region18: #{tpu_custom_call.1} parent=11 // pred_check_branch
          %162 = sbr.rel (%p160) target = $region20
        $region19: #{tpu_custom_call.1} parent=11 // pred_region
          %s164 = ssub.s32 2048, 2048
          %165 = vsyncadd [#allocation6], %s164
          %s166 = sshll.u32 [#allocation7], 4
          %s167 = int_to_ptr.vmem [resolvable:$true] %s166
          %172 = dma.hbm_to_vmem [thread:$0]  %s2, 2048, %s167, [#allocation6], 64, 64, 4
        $region20: #{tpu_custom_call.1} parent=11 // pred_fallthru
          _
        // Predicated region
        $region21: #{tpu_custom_call.1} parent=11 // pred_check
          %p173 = pneg %p106
        $region22: #{tpu_custom_call.1} parent=11 // pred_check_branch
          %175 = sbr.rel (%p173) target = $region24
        $region23: #{tpu_custom_call.1} parent=11 // pred_region
          _
        $region24: #{tpu_custom_call.1} parent=11 // pred_fallthru
          _
      $region12: #{tpu_custom_call.1} parent=5 // pred_fallthru
        _
      %p176 = scmp.lt.s32.totalorder %s17, 2
      // Predicated region
      $region25: #{tpu_custom_call.1} parent=5 // pred_check
        %p177 = pneg %p176
      $region26: #{tpu_custom_call.1} parent=5 // pred_check_branch
        %179 = sbr.rel (%p177) target = $region28
      $region27: #{tpu_custom_call.1} parent=5 // pred_region
        // Predicated region
        $region29: #{tpu_custom_call.1} parent=27 // pred_check
          %p180 = pneg %p37
        $region30: #{tpu_custom_call.1} parent=27 // pred_check_branch
          %182 = sbr.rel (%p180) target = $region32
        $region31: #{tpu_custom_call.1} parent=27 // pred_region
          %s183 = sand.u32 %s27, 1
          %s184 = scalar_lea.sflag [#allocation3], %s183
          %s185 = sand.u32 %s27, 1
          %s186 = smul.addr %s185, 8
          %s187 = scalar_lea.vmem [#allocation2], %s186
          %s188 = smul.u32 2, %s17
          %s190 = ssub.s32 128, 128
          %191 = vsyncadd %s184, %s190
          %s192 = smul.addr %s188, 64
          %s193 = scalar_lea.hbm %s0, %s192
          %s194 = sshll.u32 %s187, 4
          %s195 = int_to_ptr.vmem [resolvable:$true] %s194
          %200 = dma.hbm_to_vmem [thread:$0]  %s193, 128, %s195, %s184, 64, 64, 4
        $region32: #{tpu_custom_call.1} parent=27 // pred_fallthru
          _
      $region28: #{tpu_custom_call.1} parent=5 // pred_fallthru
        _
      %p201 = scmp.le.s32.totalorder 1, %s17
      %p202 = scmp.lt.s32.totalorder %s17, 3
      %p203 = pnand %p201, %p202
      %p204 = pneg %p203
      // Predicated region
      $region33: #{tpu_custom_call.1} parent=5 // pred_check
        _
      $region34: #{tpu_custom_call.1} parent=5 // pred_check_branch
        %206 = sbr.rel (%p203) target = $region36
      $region35: #{tpu_custom_call.1} parent=5 // pred_region
        %s207 = ssub.s32 %s17, 1
        %s208 = sand.u32 %s30, 1
        %s209 = scalar_lea.sflag [#allocation3], %s208
        %s210 = sand.u32 %s30, 1
        %s211 = smul.addr %s210, 8
        %s212 = scalar_lea.vmem [#allocation2], %s211
        // Predicated region
        $region37: #{tpu_custom_call.1} parent=35 // pred_check
          %p213 = pneg %p43
        $region38: #{tpu_custom_call.1} parent=35 // pred_check_branch
          %215 = sbr.rel (%p213) target = $region40
        $region39: #{tpu_custom_call.1} parent=35 // pred_region
          %216 = dma.done %s209, 128
        $region40: #{tpu_custom_call.1} parent=35 // pred_fallthru
          _
        // Predicated region
        $region41: #{tpu_custom_call.1} parent=35 // pred_check
          %p217 = pneg %p64
        $region42: #{tpu_custom_call.1} parent=35 // pred_check_branch
          %219 = sbr.rel (%p217) target = $region44
        $region43: #{tpu_custom_call.1} parent=35 // pred_region
          %220 = dma.done [#allocation6], 256
        $region44: #{tpu_custom_call.1} parent=35 // pred_fallthru
          _
        // Predicated region
        $region45: #{tpu_custom_call.1} parent=35 // pred_check
          %p221 = pneg %p85
        $region46: #{tpu_custom_call.1} parent=35 // pred_check_branch
          %223 = sbr.rel (%p221) target = $region48
        $region47: #{tpu_custom_call.1} parent=35 // pred_region
          %224 = dma.done [#allocation6], 2048
        $region48: #{tpu_custom_call.1} parent=35 // pred_fallthru
          _
        %s225 = sand.u32 %s30, 1
        %s226 = scalar_lea.sflag [#allocation3], %s225
        %s227 = sand.u32 %s30, 1
        %s228 = smul.addr %s227, 8
        %s229 = scalar_lea.vmem [#allocation2], %s228
        %p230 = pneg %p43
        %p231 = pneg %p40
        %p232 = pneg %p64
        %p233 = pneg %p61
        %p234 = pneg %p85
        %p235 = pneg %p82
        %p236 = pneg %p106
        %p237 = pneg %p103
        %p238 = pneg %p132
        %p239 = pneg %p129
        %s240 = sand.u32 %s119, 1
        %s241 = scalar_lea.sflag [#allocation4], %s240
        %s242 = sand.u32 %s119, 1
        %s243 = smul.addr %s242, 16
        %s244 = scalar_lea.vmem [#allocation8], %s243
        %s245 = smul.u32 2, %s22
        %s246 = smul.u32 2, %s22
        %v248 = vld [vmem:[%s212] sm:$0xf]
        %v249 = vld [vmem:[%s212 + $0x4] sm:$0xf]
        %v250 = vld [vmem:[#allocation5] sm:$0xf]
        %v251 = vld [vmem:[#allocation5 + $0x4] sm:$0xf]
        %v252 = vld [vmem:[#allocation5 + $0x8] sm:$0xf]
        %v253 = vld [vmem:[#allocation5 + $0xc] sm:$0xf]
        %v254 = vld [vmem:[%s3] sm:$0x1]
        %v256 = vlaneseq
        %v257 = vshrl.u32 %v256, 7
        %v258 = vsub.s32 0, %v257
        %v259 = vrot.slane %v254, %v258
        %v263 = vunpack.c.l.b16 %v248
        %v264 = vunpack.c.l.b16 %v249
        %v265 = vpack.c.b16 %v264, %v263
        %v270 = vunpack.c.l.b16 %v250
        %v271 = vunpack.c.l.b16 %v251
        %v272 = vunpack.c.l.b16 %v252
        %v273 = vunpack.c.l.b16 %v253
        %v274 = vpack.c.b16 %v271, %v270
        %v275 = vpack.c.b16 %v273, %v272
        %vm278 = vcmask 261120
        %v280 = vsel %vm278, %v265, 0
        %282 = vmatprep.subr.bf16.mxu0 0
        %283 = vmatpush1.bf16.msra.mxu0 %v274
        %284 = vmatprep.subr.bf16.mxu0 0
        %285 = vmatpush1.bf16.msra.mxu0 %v275
        %286 = vmatprep.subr.bf16.mxu0 0
        %287 = vmatpush1.bf16.msra.mxu0 0
        %288 = vmatprep.subr.bf16.mxu0 0
        %289 = vmatpush1.bf16.msra.mxu0 0
        %290 = vmatprep.subr.bf16.mxu0 0
        %291 = vmatpush1.bf16.msra.mxu0 0
        %292 = vmatprep.subr.bf16.mxu0 0
        %293 = vmatpush1.bf16.msra.mxu0 0
        %294 = vmatprep.subr.bf16.mxu0 0
        %295 = vmatpush1.bf16.msra.mxu0 0
        %296 = vmatprep.subr.bf16.mxu0 0
        %297 = vmatpush1.bf16.msra.mxu0 0
        %298 = vmatprep.subr.bf16.mxu0 0
        %299 = vmatpush1.bf16.msra.mxu0 0
        %300 = vmatprep.subr.bf16.mxu0 0
        %301 = vmatpush1.bf16.msra.mxu0 0
        %302 = vmatprep.subr.bf16.mxu0 0
        %303 = vmatpush1.bf16.msra.mxu0 0
        %304 = vmatprep.subr.bf16.mxu0 0
        %305 = vmatpush1.bf16.msra.mxu0 0
        %306 = vmatprep.subr.bf16.mxu0 0
        %307 = vmatpush1.bf16.msra.mxu0 0
        %308 = vmatprep.subr.bf16.mxu0 0
        %309 = vmatpush1.bf16.msra.mxu0 0
        %310 = vmatprep.subr.bf16.mxu0 0
        %311 = vmatpush1.bf16.msra.mxu0 0
        %312 = vmatprep.subr.bf16.mxu0 0
        %313 = vmatpush1.bf16.msra.mxu0 0
        %314 = vmatprep.mubr.bf16.mxu0 0
        %315 = vmatmul.mubr.bf16.gmra.mrb[0].mxu0 %v280
        %v316 = vpop.f32.mrb[0].mxu0
        %v317 = vadd.f32 %v259, %v316
        %v318 = vpop.f32.mrb[0].mxu0
        %v319 = vpop.f32.mrb[0].mxu0
        %v320 = vadd.f32 %v259, %v319
        %v321 = vpop.f32.mrb[0].mxu0
        %322 = vdwg.mxu0
        %v323 = vmax.f32 %v317, 0.0
        %v324 = vmax.f32 %v320, 0.0
        %v325 = vpack.c.bf16 %v324, %v323
        %v326 = vld [vmem:[#allocation7] sm:$0xf]
        %v327 = vld [vmem:[#allocation7 + $0x4] sm:$0xf]
        %v328 = vld [vmem:[#allocation7 + $0x8] sm:$0xf]
        %v329 = vld [vmem:[#allocation7 + $0xc] sm:$0xf]
        %v330 = vld [vmem:[#allocation7 + $0x10] sm:$0xf]
        %v331 = vld [vmem:[#allocation7 + $0x14] sm:$0xf]
        %v332 = vld [vmem:[#allocation7 + $0x18] sm:$0xf]
        %v333 = vld [vmem:[#allocation7 + $0x1c] sm:$0xf]
        %v334 = vld [vmem:[#allocation7 + $0x20] sm:$0xf]
        %v335 = vld [vmem:[#allocation7 + $0x24] sm:$0xf]
        %v336 = vld [vmem:[#allocation7 + $0x28] sm:$0xf]
        %v337 = vld [vmem:[#allocation7 + $0x2c] sm:$0xf]
        %v338 = vld [vmem:[#allocation7 + $0x30] sm:$0xf]
        %v339 = vld [vmem:[#allocation7 + $0x34] sm:$0xf]
        %v340 = vld [vmem:[#allocation7 + $0x38] sm:$0xf]
        %v341 = vld [vmem:[#allocation7 + $0x3c] sm:$0xf]
        %s342 = scalar_lea.vmem %s3, 1
        %v343 = vld [vmem:[%s342] sm:$0x1]
        %v345 = vlaneseq
        %v346 = vshrl.u32 %v345, 7
        %v347 = vsub.s32 0, %v346
        %v348 = vrot.slane %v343, %v347
        %v366 = vunpack.c.l.b16 %v326
        %v367 = vunpack.c.l.b16 %v327
        %v368 = vunpack.c.l.b16 %v328
        %v369 = vunpack.c.l.b16 %v329
        %v370 = vunpack.c.l.b16 %v330
        %v371 = vunpack.c.l.b16 %v331
        %v372 = vunpack.c.l.b16 %v332
        %v373 = vunpack.c.l.b16 %v333
        %v374 = vunpack.c.l.b16 %v334
        %v375 = vunpack.c.l.b16 %v335
        %v376 = vunpack.c.l.b16 %v336
        %v377 = vunpack.c.l.b16 %v337
        %v378 = vunpack.c.l.b16 %v338
        %v379 = vunpack.c.l.b16 %v339
        %v380 = vunpack.c.l.b16 %v340
        %v381 = vunpack.c.l.b16 %v341
        %v382 = vpack.c.b16 %v367, %v366
        %v383 = vpack.c.b16 %v369, %v368
        %v384 = vpack.c.b16 %v371, %v370
        %v385 = vpack.c.b16 %v373, %v372
        %v386 = vpack.c.b16 %v375, %v374
        %v387 = vpack.c.b16 %v377, %v376
        %v388 = vpack.c.b16 %v379, %v378
        %v389 = vpack.c.b16 %v381, %v380
        %398 = vmatprep.subr.bf16.mxu0 0
        %399 = vmatpush1.bf16.msra.mxu0 %v382
        %400 = vmatprep.subr.bf16.mxu0 0
        %401 = vmatpush1.bf16.msra.mxu0 %v383
        %402 = vmatprep.subr.bf16.mxu0 0
        %403 = vmatpush1.bf16.msra.mxu0 %v384
        %404 = vmatprep.subr.bf16.mxu0 0
        %405 = vmatpush1.bf16.msra.mxu0 %v385
        %406 = vmatprep.subr.bf16.mxu0 0
        %407 = vmatpush1.bf16.msra.mxu0 %v386
        %408 = vmatprep.subr.bf16.mxu0 0
        %409 = vmatpush1.bf16.msra.mxu0 %v387
        %410 = vmatprep.subr.bf16.mxu0 0
        %411 = vmatpush1.bf16.msra.mxu0 %v388
        %412 = vmatprep.subr.bf16.mxu0 0
        %413 = vmatpush1.bf16.msra.mxu0 %v389
        %414 = vmatprep.subr.bf16.mxu0 0
        %415 = vmatpush1.bf16.msra.mxu0 0
        %416 = vmatprep.subr.bf16.mxu0 0
        %417 = vmatpush1.bf16.msra.mxu0 0
        %418 = vmatprep.subr.bf16.mxu0 0
        %419 = vmatpush1.bf16.msra.mxu0 0
        %420 = vmatprep.subr.bf16.mxu0 0
        %421 = vmatpush1.bf16.msra.mxu0 0
        %422 = vmatprep.subr.bf16.mxu0 0
        %423 = vmatpush1.bf16.msra.mxu0 0
        %424 = vmatprep.subr.bf16.mxu0 0
        %425 = vmatpush1.bf16.msra.mxu0 0
        %426 = vmatprep.subr.bf16.mxu0 0
        %427 = vmatpush1.bf16.msra.mxu0 0
        %428 = vmatprep.subr.bf16.mxu0 0
        %429 = vmatpush1.bf16.msra.mxu0 0
        %430 = vmatprep.mubr.bf16.mxu0 0
        %431 = vmatmul.mubr.bf16.gmra.mrb[0].mxu0 %v325
        %v432 = vpop.f32.mrb[0].mxu0
        %v433 = vadd.f32 %v348, %v432
        %v434 = vpop.f32.mrb[0].mxu0
        %v435 = vpop.f32.mrb[0].mxu0
        %v436 = vadd.f32 %v348, %v435
        %v437 = vpop.f32.mrb[0].mxu0
        %438 = vdwg.mxu0
        %v439 = vmax.f32 %v433, 0.0
        %v440 = vmax.f32 %v436, 0.0
        %v441 = vpack.c.bf16 %v440, %v439
        %s442 = scalar_lea.vmem [#allocation7], 64
        %v443 = vld [vmem:[%s442] sm:$0xf]
        %v444 = vld [vmem:[%s442 + $0x4] sm:$0xf]
        %v445 = vld [vmem:[%s442 + $0x8] sm:$0xf]
        %v446 = vld [vmem:[%s442 + $0xc] sm:$0xf]
        %v447 = vld [vmem:[%s442 + $0x10] sm:$0xf]
        %v448 = vld [vmem:[%s442 + $0x14] sm:$0xf]
        %v449 = vld [vmem:[%s442 + $0x18] sm:$0xf]
        %v450 = vld [vmem:[%s442 + $0x1c] sm:$0xf]
        %v451 = vld [vmem:[%s442 + $0x20] sm:$0xf]
        %v452 = vld [vmem:[%s442 + $0x24] sm:$0xf]
        %v453 = vld [vmem:[%s442 + $0x28] sm:$0xf]
        %v454 = vld [vmem:[%s442 + $0x2c] sm:$0xf]
        %v455 = vld [vmem:[%s442 + $0x30] sm:$0xf]
        %v456 = vld [vmem:[%s442 + $0x34] sm:$0xf]
        %v457 = vld [vmem:[%s442 + $0x38] sm:$0xf]
        %v458 = vld [vmem:[%s442 + $0x3c] sm:$0xf]
        %s459 = scalar_lea.vmem %s3, 2
        %v460 = vld [vmem:[%s459] sm:$0x1]
        %v462 = vlaneseq
        %v463 = vshrl.u32 %v462, 7
        %v464 = vsub.s32 0, %v463
        %v465 = vrot.slane %v460, %v464
        %v483 = vunpack.c.l.b16 %v443
        %v484 = vunpack.c.l.b16 %v444
        %v485 = vunpack.c.l.b16 %v445
        %v486 = vunpack.c.l.b16 %v446
        %v487 = vunpack.c.l.b16 %v447
        %v488 = vunpack.c.l.b16 %v448
        %v489 = vunpack.c.l.b16 %v449
        %v490 = vunpack.c.l.b16 %v450
        %v491 = vunpack.c.l.b16 %v451
        %v492 = vunpack.c.l.b16 %v452
        %v493 = vunpack.c.l.b16 %v453
        %v494 = vunpack.c.l.b16 %v454
        %v495 = vunpack.c.l.b16 %v455
        %v496 = vunpack.c.l.b16 %v456
        %v497 = vunpack.c.l.b16 %v457
        %v498 = vunpack.c.l.b16 %v458
        %v499 = vpack.c.b16 %v484, %v483
        %v500 = vpack.c.b16 %v486, %v485
        %v501 = vpack.c.b16 %v488, %v487
        %v502 = vpack.c.b16 %v490, %v489
        %v503 = vpack.c.b16 %v492, %v491
        %v504 = vpack.c.b16 %v494, %v493
        %v505 = vpack.c.b16 %v496, %v495
        %v506 = vpack.c.b16 %v498, %v497
        %515 = vmatprep.subr.bf16.mxu0 0
        %516 = vmatpush1.bf16.msra.mxu0 %v499
        %517 = vmatprep.subr.bf16.mxu0 0
        %518 = vmatpush1.bf16.msra.mxu0 %v500
        %519 = vmatprep.subr.bf16.mxu0 0
        %520 = vmatpush1.bf16.msra.mxu0 %v501
        %521 = vmatprep.subr.bf16.mxu0 0
        %522 = vmatpush1.bf16.msra.mxu0 %v502
        %523 = vmatprep.subr.bf16.mxu0 0
        %524 = vmatpush1.bf16.msra.mxu0 %v503
        %525 = vmatprep.subr.bf16.mxu0 0
        %526 = vmatpush1.bf16.msra.mxu0 %v504
        %527 = vmatprep.subr.bf16.mxu0 0
        %528 = vmatpush1.bf16.msra.mxu0 %v505
        %529 = vmatprep.subr.bf16.mxu0 0
        %530 = vmatpush1.bf16.msra.mxu0 %v506
        %531 = vmatprep.subr.bf16.mxu0 0
        %532 = vmatpush1.bf16.msra.mxu0 0
        %533 = vmatprep.subr.bf16.mxu0 0
        %534 = vmatpush1.bf16.msra.mxu0 0
        %535 = vmatprep.subr.bf16.mxu0 0
        %536 = vmatpush1.bf16.msra.mxu0 0
        %537 = vmatprep.subr.bf16.mxu0 0
        %538 = vmatpush1.bf16.msra.mxu0 0
        %539 = vmatprep.subr.bf16.mxu0 0
        %540 = vmatpush1.bf16.msra.mxu0 0
        %541 = vmatprep.subr.bf16.mxu0 0
        %542 = vmatpush1.bf16.msra.mxu0 0
        %543 = vmatprep.subr.bf16.mxu0 0
        %544 = vmatpush1.bf16.msra.mxu0 0
        %545 = vmatprep.subr.bf16.mxu0 0
        %546 = vmatpush1.bf16.msra.mxu0 0
        %547 = vmatprep.mubr.bf16.mxu0 0
        %548 = vmatmul.mubr.bf16.gmra.mrb[0].mxu0 %v441
        %v549 = vpop.f32.mrb[0].mxu0
        %v550 = vadd.f32 %v465, %v549
        %v551 = vpop.f32.mrb[0].mxu0
        %v552 = vpop.f32.mrb[0].mxu0
        %v553 = vadd.f32 %v465, %v552
        %v554 = vpop.f32.mrb[0].mxu0
        %555 = vdwg.mxu0
        %556 = vst [vmem:[%s244] sm:$0xff] %v550
        %557 = vst [vmem:[%s244 + $0x8] sm:$0xff] %v553
        %s558 = sand.u32 %s119, 1
        %s559 = scalar_lea.sflag [#allocation4], %s558
        %s560 = sand.u32 %s119, 1
        %s561 = smul.addr %s560, 16
        %s562 = scalar_lea.vmem [#allocation8], %s561
        // Predicated region
        $region49: #{tpu_custom_call.1} parent=35 // pred_check
          %p563 = pneg %p129
        $region50: #{tpu_custom_call.1} parent=35 // pred_check_branch
          %565 = sbr.rel (%p563) target = $region52
        $region51: #{tpu_custom_call.1} parent=35 // pred_region
          %s566 = smul.u32 2, %s22
          %s568 = ssub.s32 256, 256
          %569 = vsyncadd %s559, %s568
          %s570 = smul.addr %s566, 128
          %s571 = scalar_lea.hbm %s4, %s570
          %s572 = sshll.u32 %s562, 4
          %s573 = int_to_ptr.vmem [resolvable:$true] %s572
          %578 = dma.vmem_to_hbm [thread:$0]  %s573, 256, %s571, %s559, 128, 128, 8
        $region52: #{tpu_custom_call.1} parent=35 // pred_fallthru
          _
      $region36: #{tpu_custom_call.1} parent=5 // pred_fallthru
        _
      %p579 = scmp.le.s32.totalorder 2, %s17
      // Predicated region
      $region53: #{tpu_custom_call.1} parent=5 // pred_check
        %p580 = pneg %p579
      $region54: #{tpu_custom_call.1} parent=5 // pred_check_branch
        %582 = sbr.rel (%p580) target = $region56
      $region55: #{tpu_custom_call.1} parent=5 // pred_region
        %s583 = ssub.s32 %s17, 2
        // Predicated region
        $region57: #{tpu_custom_call.1} parent=55 // pred_check
          %p584 = pneg %p135
        $region58: #{tpu_custom_call.1} parent=55 // pred_check_branch
          %586 = sbr.rel (%p584) target = $region60
        $region59: #{tpu_custom_call.1} parent=55 // pred_region
          %s587 = sand.u32 %s120, 1
          %s588 = scalar_lea.sflag [#allocation4], %s587
          %s589 = sand.u32 %s120, 1
          %s590 = smul.addr %s589, 16
          %s591 = scalar_lea.vmem [#allocation8], %s590
          %592 = dma.done %s588, 256
        $region60: #{tpu_custom_call.1} parent=55 // pred_fallthru
          _
      $region56: #{tpu_custom_call.1} parent=5 // pred_fallthru
        _
    $region6: #{tpu_custom_call.1} parent=1 // loop_footer
      %s21 = sadd.s32 1, %s17
    $region7: #{tpu_custom_call.1} parent=1 // loop_footer_branch
      %16 = sbr.rel target = $region3
    $region8: #{tpu_custom_call.1} parent=1 // loop_exit
      _
    %593 = vsyncpa [#allocation3], 1
    %s594 = scalar_lea.sflag [#allocation3], 1
    %595 = vsyncpa %s594, 1
    %596 = vsyncpa [#allocation6], 1
    %597 = vsyncpa [#allocation4], 1
    %s598 = scalar_lea.sflag [#allocation4], 1
    %599 = vsyncpa %s598, 1

</llo_original>
